<compile_context>
chip_gen: v7x
topology: tpu7x:2x2x1
jax: 0.10.0
libtpu: 0.0.40
codegen_flags: <defaults>
</compile_context>

<pallas_src>
import jax
import jax.numpy as jnp
from jax.experimental import pallas as pl
from jax.experimental.pallas import tpu as pltpu

# ----- cfg (small, consistent with the module's __init__) -----
B = 2
C_IN = 3
INPUT_SIZE = 16          # cfg.input_size
PATCH = 8                # cfg.dino_patch_size
HP = INPUT_SIZE // PATCH # patches per side
N_PATCHES = HP * HP      # 4
DINO_DIM = 32            # cfg.dino_dim
N_FEATS = 48             # internal backbone width (simplified DINO)
MLP_HIDDEN = 64          # cfg.mlp_hidden_size
PROJ_SIZE = 32           # cfg.projection_size
PROJ_PAD = 128           # lane-dense padded projection width
BN_EPS = 1e-5

PATCH_VEC = C_IN * PATCH * PATCH           # 192
PROJ_IN = DINO_DIM * N_PATCHES             # 128 = dino_dim * (input_size/patch)^2
IN_FLAT = C_IN * INPUT_SIZE * INPUT_SIZE   # 768

# aux-array row layout (all rows 128 lanes wide, f32):
#   rows [0, MLP_HIDDEN)      : w2, zero-padded from PROJ_SIZE to 128 columns
#   row  MLP_HIDDEN           : b2 (padded to 128)
#   row  MLP_HIDDEN + 1       : b_fold  (first MLP_HIDDEN lanes valid)
#   row  MLP_HIDDEN + 2       : gamma   (first MLP_HIDDEN lanes valid)
#   row  MLP_HIDDEN + 3       : beta    (first MLP_HIDDEN lanes valid)
AUX_ROWS = MLP_HIDDEN + 8    # padded to a sublane multiple

_HI = jax.lax.Precision.HIGHEST


# ---------------- fused kernel ----------------

def byol_fused_kernel(x_ref, w_ref, aux_ref, out_ref):
    # Static slices of the packed aux operand (zero-cost ref views).
    b1    = aux_ref[MLP_HIDDEN + 1:MLP_HIDDEN + 2, 0:MLP_HIDDEN]   # (1, 64)
    gamma = aux_ref[MLP_HIDDEN + 2:MLP_HIDDEN + 3, 0:MLP_HIDDEN]   # (1, 64)
    beta  = aux_ref[MLP_HIDDEN + 3:MLP_HIDDEN + 4, 0:MLP_HIDDEN]   # (1, 64)

    # Linear 1 (DINO-approx encoder folded into the projector's first Linear):
    #   (B, C*H*W) bf16 @ (C*H*W, hidden) bf16 -> f32 accumulate on the MXU.
    h = jnp.dot(x_ref[...], w_ref[...],
                preferred_element_type=jnp.float32) + b1

    # BatchNorm1d, training-mode batch stats, single-pass (sum + sum-of-squares),
    # all in f32 (v5e-safe).  Variance clamped so f32 cancellation cannot NaN.
    inv_n = 1.0 / h.shape[0]
    mean = jnp.sum(h, axis=0, keepdims=True) * inv_n
    mean_sq = jnp.sum(h * h, axis=0, keepdims=True) * inv_n
    var = jnp.maximum(mean_sq - mean * mean, 0.0)
    h = gamma * (h - mean) * jax.lax.rsqrt(var + BN_EPS) + beta

    # ReLU
    h = jnp.maximum(h, 0.0)

    # Linear 2: (B, hidden) @ (hidden, 128).  Output is lane-dense (128 lanes,
    # zero-padded columns), so the store is an unmasked vst.
    w2 = aux_ref[0:MLP_HIDDEN, :]                 # (64, 128)
    b2 = aux_ref[MLP_HIDDEN:MLP_HIDDEN + 1, :]    # (1, 128)
    out_ref[...] = jnp.dot(h, w2, preferred_element_type=jnp.float32) + b2


# ---------------- wrapper ----------------

def byol_forward(x, fused_params):
    # layout: x is NCHW (B, C, H, W) float32, as in the PyTorch module.
    Bx = x.shape[0]
    # Contiguous flatten (no runtime transpose); bf16 halves the activation DMA.
    x_flat = x.reshape(Bx, -1).astype(jnp.bfloat16)

    w_x, aux = fused_params
    vmem = pl.BlockSpec(memory_space=pltpu.MemorySpace.VMEM)

    flops = 2 * Bx * (IN_FLAT * MLP_HIDDEN + MLP_HIDDEN * PROJ_PAD)
    bytes_accessed = (x_flat.size * 2          # bf16 activations
                      + w_x.size * 2           # bf16 folded weight
                      + aux.size * 4           # packed f32 small params
                      + Bx * PROJ_PAD * 4)     # f32 padded output

    out = pl.pallas_call(
        byol_fused_kernel,
        out_shape=jax.ShapeDtypeStruct((Bx, PROJ_PAD), jnp.float32),
        in_specs=[vmem, vmem, vmem],
        out_specs=vmem,
        cost_estimate=pl.CostEstimate(flops=flops,
                                      transcendentals=MLP_HIDDEN,
                                      bytes_accessed=bytes_accessed),
    )(x_flat, w_x, aux)

    return out[:, :PROJ_SIZE]


# ---------------- offline parameter folding ----------------

def prepare_fused_params(params):
    """One-time (offline) folding of the linear encoder into the first projector
    Linear, with all layout permutations absorbed into the weight rows, plus
    packing of all small per-feature operands into one 128-lane aux array."""
    we, be, wh, bh, w1, b1, gamma, beta, w2, b2 = params

    # 1) Compose the two encoder linear maps: patch-embed then 1x1 head.
    wc = jnp.dot(we, wh, precision=_HI)            # (PATCH_VEC, DINO_DIM)
    bc = jnp.dot(be, wh, precision=_HI) + bh       # (1, DINO_DIM)

    # 2) Undo PyTorch's channel-major flatten (view(B,-1) on (B,D,h,w),
    #    index = d*N_PATCHES + p) by re-indexing w1's rows to patch-major.
    w1p = w1.reshape(DINO_DIM, N_PATCHES, MLP_HIDDEN).transpose(1, 0, 2)  # (P,D,Hid)

    # 3) Fold the encoder (block-diagonal over patches) into the first Linear.
    w_fold = jnp.einsum("kd,pdh->pkh", wc, w1p,
                        precision=_HI).reshape(N_PATCHES * PATCH_VEC, MLP_HIDDEN)
    b_fold = jnp.einsum("d,pdh->h", bc[0], w1p, precision=_HI)[None, :] + b1

    # 4) Fold the NCHW -> (patch, c, u, v) layout permutation into the weight
    #    rows so the kernel consumes x.reshape(B, C*H*W) directly.
    w_x = (w_fold
           .reshape(HP, HP, C_IN, PATCH, PATCH, MLP_HIDDEN)   # (i, j, c, u, v, t)
           .transpose(2, 0, 3, 1, 4, 5)                       # (c, i, u, j, v, t)
           .reshape(IN_FLAT, MLP_HIDDEN))
    w_x = w_x.astype(jnp.bfloat16)   # dominant operand: halve its DMA, feed MXU bf16

    # 5) Pack all small per-feature operands into ONE lane-dense f32 array
    #    (drops the input-DMA count from 7 to 3).
    aux = jnp.zeros((AUX_ROWS, PROJ_PAD), jnp.float32)
    aux = aux.at[0:MLP_HIDDEN, 0:PROJ_SIZE].set(w2)        # w2, zero-padded cols
    aux = aux.at[MLP_HIDDEN, 0:PROJ_SIZE].set(b2[0])       # b2, zero-padded
    aux = aux.at[MLP_HIDDEN + 1, 0:MLP_HIDDEN].set(b_fold[0])
    aux = aux.at[MLP_HIDDEN + 2, 0:MLP_HIDDEN].set(gamma[0])
    aux = aux.at[MLP_HIDDEN + 3, 0:MLP_HIDDEN].set(beta[0])

    return (w_x, aux)


def init_params(key):
    ks = jax.random.split(key, 8)
    we = 0.02 * jax.random.normal(ks[0], (PATCH_VEC, N_FEATS), jnp.float32)
    be = jnp.zeros((1, N_FEATS), jnp.float32)
    wh = 0.05 * jax.random.normal(ks[1], (N_FEATS, DINO_DIM), jnp.float32)
    bh = jnp.zeros((1, DINO_DIM), jnp.float32)
    w1 = 0.05 * jax.random.normal(ks[2], (PROJ_IN, MLP_HIDDEN), jnp.float32)
    b1 = 0.01 * jax.random.normal(ks[3], (1, MLP_HIDDEN), jnp.float32)
    gamma = jnp.ones((1, MLP_HIDDEN), jnp.float32)
    beta = jnp.zeros((1, MLP_HIDDEN), jnp.float32)
    w2 = 0.05 * jax.random.normal(ks[4], (MLP_HIDDEN, PROJ_SIZE), jnp.float32)
    b2 = 0.01 * jax.random.normal(ks[5], (1, PROJ_SIZE), jnp.float32)
    return (we, be, wh, bh, w1, b1, gamma, beta, w2, b2)


# ---------------- pure-JAX reference (original unfused math) ----------------

def byol_reference(x, params):
    we, be, wh, bh, w1, b1, gamma, beta, w2, b2 = params
    Bx, C, H, W = x.shape
    hp, wp = H // PATCH, W // PATCH
    patches = x.reshape(Bx, C, hp, PATCH, wp, PATCH).transpose(0, 2, 4, 1, 3, 5)
    patches = patches.reshape(Bx * hp * wp, C * PATCH * PATCH)
    feats = patches @ we + be
    code = feats @ wh + bh                                   # (B*P, D)
    # channel-major flatten, as PyTorch .view(B, -1) on (B, D, h, w)
    z = code.reshape(Bx, hp * wp, DINO_DIM).transpose(0, 2, 1).reshape(Bx, -1)
    h = z @ w1 + b1
    mean = h.mean(axis=0, keepdims=True)
    var = ((h - mean) ** 2).mean(axis=0, keepdims=True)
    h = gamma * (h - mean) * jax.lax.rsqrt(var + BN_EPS) + beta
    h = jnp.maximum(h, 0.0)
    return h @ w2 + b2


if __name__ == "__main__":
    key = jax.random.PRNGKey(0)
    k_x, k_p = jax.random.split(key)
    x = jax.random.normal(k_x, (B, C_IN, INPUT_SIZE, INPUT_SIZE), jnp.float32)
    params = init_params(k_p)
    fused = prepare_fused_params(params)

    out = jax.jit(byol_forward)(x, fused)
    out = jax.block_until_ready(out)

    assert out.shape == (B, PROJ_SIZE) and out.dtype == jnp.float32
    ref = byol_reference(x, params)
    err = float(jnp.max(jnp.abs(out - ref)))
    assert err < 5e-2, f"mismatch vs unfused reference: max abs err = {err}"
    print("KERNEL_OK")
</pallas_src>

<mosaic_0001>
module attributes {stable_mosaic.version = 11 : i64} {
  func.func @byol_fused_kernel(%arg0: memref<2x768xbf16, #tpu.memory_space<vmem>>, %arg1: memref<768x64xbf16, #tpu.memory_space<vmem>>, %arg2: memref<72x128xf32, #tpu.memory_space<vmem>>, %arg3: memref<2x128xf32, #tpu.memory_space<vmem>>) attributes {dimension_semantics = [], scalar_prefetch = 0 : i64, scratch_operands = 0 : i64, tpu.core_type = #tpu.core_type<tc>} {
    %c65 = arith.constant 65 : index
    %c0 = arith.constant 0 : index
    %0 = vector.load %arg2[%c65, %c0] : memref<72x128xf32, #tpu.memory_space<vmem>>, vector<1x64xf32>
    %c66 = arith.constant 66 : index
    %c0_0 = arith.constant 0 : index
    %1 = vector.load %arg2[%c66, %c0_0] : memref<72x128xf32, #tpu.memory_space<vmem>>, vector<1x64xf32>
    %c67 = arith.constant 67 : index
    %c0_1 = arith.constant 0 : index
    %2 = vector.load %arg2[%c67, %c0_1] : memref<72x128xf32, #tpu.memory_space<vmem>>, vector<1x64xf32>
    %c0_2 = arith.constant 0 : index
    %c0_3 = arith.constant 0 : index
    %3 = vector.load %arg0[%c0_2, %c0_3] : memref<2x768xbf16, #tpu.memory_space<vmem>>, vector<2x768xbf16>
    %c0_4 = arith.constant 0 : index
    %c0_5 = arith.constant 0 : index
    %4 = vector.load %arg1[%c0_4, %c0_5] : memref<768x64xbf16, #tpu.memory_space<vmem>>, vector<768x64xbf16>
    %cst = arith.constant dense<0.000000e+00> : vector<2x64xf32>
    %5 = tpu.matmul %3, %4, %cst {dimension_numbers = #tpu.dot_dimension_numbers<[1], [0], [0], [1], [0, 0, 1, 1], [], []>} : vector<2x768xbf16>, vector<768x64xbf16>, vector<2x64xf32> -> vector<2x64xf32>
    %6 = vector.broadcast %0 : vector<1x64xf32> to vector<2x64xf32>
    %7 = arith.addf %5, %6 : vector<2x64xf32>
    %cst_6 = arith.constant dense<0.000000e+00> : vector<64xf32>
    %8 = vector.multi_reduction <add>, %7, %cst_6 [0] : vector<2x64xf32> to vector<64xf32>
    %9 = vector.shape_cast %8 : vector<64xf32> to vector<1x64xf32>
    %cst_7 = arith.constant 5.000000e-01 : f32
    %10 = vector.broadcast %cst_7 : f32 to vector<1x64xf32>
    %11 = arith.mulf %9, %10 : vector<1x64xf32>
    %12 = arith.mulf %7, %7 : vector<2x64xf32>
    %cst_8 = arith.constant dense<0.000000e+00> : vector<64xf32>
    %13 = vector.multi_reduction <add>, %12, %cst_8 [0] : vector<2x64xf32> to vector<64xf32>
    %14 = vector.shape_cast %13 : vector<64xf32> to vector<1x64xf32>
    %cst_9 = arith.constant 5.000000e-01 : f32
    %15 = vector.broadcast %cst_9 : f32 to vector<1x64xf32>
    %16 = arith.mulf %14, %15 : vector<1x64xf32>
    %17 = arith.mulf %11, %11 : vector<1x64xf32>
    %18 = arith.subf %16, %17 : vector<1x64xf32>
    %cst_10 = arith.constant 0.000000e+00 : f32
    %19 = vector.broadcast %cst_10 : f32 to vector<1x64xf32>
    %20 = arith.maximumf %18, %19 : vector<1x64xf32>
    %21 = vector.broadcast %11 : vector<1x64xf32> to vector<2x64xf32>
    %22 = arith.subf %7, %21 : vector<2x64xf32>
    %23 = vector.broadcast %1 : vector<1x64xf32> to vector<2x64xf32>
    %24 = arith.mulf %23, %22 : vector<2x64xf32>
    %cst_11 = arith.constant 9.99999974E-6 : f32
    %25 = vector.broadcast %cst_11 : f32 to vector<1x64xf32>
    %26 = arith.addf %20, %25 : vector<1x64xf32>
    %27 = math.rsqrt %26 : vector<1x64xf32>
    %28 = vector.broadcast %27 : vector<1x64xf32> to vector<2x64xf32>
    %29 = arith.mulf %24, %28 : vector<2x64xf32>
    %30 = vector.broadcast %2 : vector<1x64xf32> to vector<2x64xf32>
    %31 = arith.addf %29, %30 : vector<2x64xf32>
    %cst_12 = arith.constant 0.000000e+00 : f32
    %32 = vector.broadcast %cst_12 : f32 to vector<2x64xf32>
    %33 = arith.maximumf %31, %32 : vector<2x64xf32>
    %c0_13 = arith.constant 0 : index
    %c0_14 = arith.constant 0 : index
    %34 = vector.load %arg2[%c0_13, %c0_14] : memref<72x128xf32, #tpu.memory_space<vmem>>, vector<64x128xf32>
    %c64 = arith.constant 64 : index
    %c0_15 = arith.constant 0 : index
    %35 = vector.load %arg2[%c64, %c0_15] : memref<72x128xf32, #tpu.memory_space<vmem>>, vector<1x128xf32>
    %cst_16 = arith.constant dense<0.000000e+00> : vector<2x128xf32>
    %36 = tpu.matmul %33, %34, %cst_16 {dimension_numbers = #tpu.dot_dimension_numbers<[1], [0], [0], [1], [0, 0, 1, 1], [], []>} : vector<2x64xf32>, vector<64x128xf32>, vector<2x128xf32> -> vector<2x128xf32>
    %37 = vector.broadcast %35 : vector<1x128xf32> to vector<2x128xf32>
    %38 = arith.addf %36, %37 : vector<2x128xf32>
    %c0_17 = arith.constant 0 : index
    %c0_18 = arith.constant 0 : index
    %39 = vector.load %arg3[%c0_17, %c0_18] : memref<2x128xf32, #tpu.memory_space<vmem>>, vector<2x128xf32>
    tpu.vector_store %arg3[%c0_17, %c0_18], %38 {strides = array<i32>} : memref<2x128xf32, #tpu.memory_space<vmem>>, vector<2x128xf32>,
    return
  }
}

</mosaic_0001>

<llo_original>
// kernel: byol_forward.1
$region0: #{byol_forward.1}
  #allocation0 [shape = 'u32[]', space=smem, size = 0x4, offset = 0x4, fixed_abs, tag = 'smem constant byte address 0x4 - core index']
  #allocation1 [shape = 'u32[144,128]{1,0:T(1,128)}', space=vmem, size = 0x12000, scoped, tag = 'internal scratch']
  %s0 = inlined_call_operand.vmem [shape: bf16[2,768], index: 0, kind: input, shape index: {}]
  %s1 = inlined_call_operand.vmem [shape: bf16[768,64], index: 1, kind: input, shape index: {}]
  %s2 = inlined_call_operand.vmem [shape: f32[72,128], index: 2, kind: input, shape index: {}]
  %s3 = inlined_call_operand.hbm [shape: f32[2,128], index: 3, kind: output, shape index: {}]
  %s4 = sld [smem:[#allocation0]]
  $region22: #{byol_forward.1} parent=0
    _
  %s6 = ssub.s32 1, %s4
  %s7 = scalar_select 0, %s6, %s4
  $region1: #{byol_forward.1} parent=0
    #allocation2 [shape = 'u8[1024]{0}', space=vmem, size = 0x400, scoped, tag = 'output window, operand 0, single buffered']
    #allocation3 [shape = 's32[1]{0}', space=sflag, size = 0x4, scoped, tag = 'scoped memory for byol_forward.1']
    %8 = vsyncpa [#allocation3], 0
    // Predicated region
    $region2: #{byol_forward.1} parent=1 // pred_check
      _
    $region3: #{byol_forward.1} parent=1 // pred_check_branch
      %10 = sbr.rel (0) target = $region5
    $region4: #{byol_forward.1} parent=1 // pred_region
      _
    $region5: #{byol_forward.1} parent=1 // pred_fallthru
      _
    // Predicated region
    $region6: #{byol_forward.1} parent=1 // pred_check
      _
    $region7: #{byol_forward.1} parent=1 // pred_check_branch
      %12 = sbr.rel (0) target = $region9
    $region8: #{byol_forward.1} parent=1 // pred_region
      _
    $region9: #{byol_forward.1} parent=1 // pred_fallthru
      _
    // Predicated region
    $region10: #{byol_forward.1} parent=1 // pred_check
      _
    $region11: #{byol_forward.1} parent=1 // pred_check_branch
      %14 = sbr.rel (0) target = $region13
    $region12: #{byol_forward.1} parent=1 // pred_region
      _
    $region13: #{byol_forward.1} parent=1 // pred_fallthru
      _
    %v16 = vld [vmem:[%s2 + $0x41] sm:$0x1]
    %v17 = vld [vmem:[%s2 + $0x42] sm:$0x1]
    %v18 = vld [vmem:[%s2 + $0x43] sm:$0x1]
    %v19 = vld [vmem:[%s0] sm:$0x3f]
    %v20 = vld [vmem:[%s1] sm:$0xf]
    %v21 = vld [vmem:[%s1 + $0x4] sm:$0xf]
    %v22 = vld [vmem:[%s1 + $0x8] sm:$0xf]
    %v23 = vld [vmem:[%s1 + $0xc] sm:$0xf]
    %v24 = vld [vmem:[%s1 + $0x10] sm:$0xf]
    %v25 = vld [vmem:[%s1 + $0x14] sm:$0xf]
    %v26 = vld [vmem:[%s1 + $0x18] sm:$0xf]
    %v27 = vld [vmem:[%s1 + $0x1c] sm:$0xf]
    %v28 = vld [vmem:[%s1 + $0x20] sm:$0xf]
    %v29 = vld [vmem:[%s1 + $0x24] sm:$0xf]
    %v30 = vld [vmem:[%s1 + $0x28] sm:$0xf]
    %v31 = vld [vmem:[%s1 + $0x2c] sm:$0xf]
    %v32 = vld [vmem:[%s1 + $0x30] sm:$0xf]
    %v33 = vld [vmem:[%s1 + $0x34] sm:$0xf]
    %v34 = vld [vmem:[%s1 + $0x38] sm:$0xf]
    %v35 = vld [vmem:[%s1 + $0x3c] sm:$0xf]
    %v36 = vld [vmem:[%s1 + $0x40] sm:$0xf]
    %v37 = vld [vmem:[%s1 + $0x44] sm:$0xf]
    %v38 = vld [vmem:[%s1 + $0x48] sm:$0xf]
    %v39 = vld [vmem:[%s1 + $0x4c] sm:$0xf]
    %v40 = vld [vmem:[%s1 + $0x50] sm:$0xf]
    %v41 = vld [vmem:[%s1 + $0x54] sm:$0xf]
    %v42 = vld [vmem:[%s1 + $0x58] sm:$0xf]
    %v43 = vld [vmem:[%s1 + $0x5c] sm:$0xf]
    %v44 = vld [vmem:[%s1 + $0x60] sm:$0xf]
    %v45 = vld [vmem:[%s1 + $0x64] sm:$0xf]
    %v46 = vld [vmem:[%s1 + $0x68] sm:$0xf]
    %v47 = vld [vmem:[%s1 + $0x6c] sm:$0xf]
    %v48 = vld [vmem:[%s1 + $0x70] sm:$0xf]
    %v49 = vld [vmem:[%s1 + $0x74] sm:$0xf]
    %v50 = vld [vmem:[%s1 + $0x78] sm:$0xf]
    %v51 = vld [vmem:[%s1 + $0x7c] sm:$0xf]
    %v52 = vld [vmem:[%s1 + $0x80] sm:$0xf]
    %v53 = vld [vmem:[%s1 + $0x84] sm:$0xf]
    %v54 = vld [vmem:[%s1 + $0x88] sm:$0xf]
    %v55 = vld [vmem:[%s1 + $0x8c] sm:$0xf]
    %v56 = vld [vmem:[%s1 + $0x90] sm:$0xf]
    %v57 = vld [vmem:[%s1 + $0x94] sm:$0xf]
    %v58 = vld [vmem:[%s1 + $0x98] sm:$0xf]
    %v59 = vld [vmem:[%s1 + $0x9c] sm:$0xf]
    %v60 = vld [vmem:[%s1 + $0xa0] sm:$0xf]
    %v61 = vld [vmem:[%s1 + $0xa4] sm:$0xf]
    %v62 = vld [vmem:[%s1 + $0xa8] sm:$0xf]
    %v63 = vld [vmem:[%s1 + $0xac] sm:$0xf]
    %v64 = vld [vmem:[%s1 + $0xb0] sm:$0xf]
    %v65 = vld [vmem:[%s1 + $0xb4] sm:$0xf]
    %v66 = vld [vmem:[%s1 + $0xb8] sm:$0xf]
    %v67 = vld [vmem:[%s1 + $0xbc] sm:$0xf]
    %v68 = vld [vmem:[%s1 + $0xc0] sm:$0xf]
    %v69 = vld [vmem:[%s1 + $0xc4] sm:$0xf]
    %v70 = vld [vmem:[%s1 + $0xc8] sm:$0xf]
    %v71 = vld [vmem:[%s1 + $0xcc] sm:$0xf]
    %v72 = vld [vmem:[%s1 + $0xd0] sm:$0xf]
    %v73 = vld [vmem:[%s1 + $0xd4] sm:$0xf]
    %v74 = vld [vmem:[%s1 + $0xd8] sm:$0xf]
    %v75 = vld [vmem:[%s1 + $0xdc] sm:$0xf]
    %v76 = vld [vmem:[%s1 + $0xe0] sm:$0xf]
    %v77 = vld [vmem:[%s1 + $0xe4] sm:$0xf]
    %v78 = vld [vmem:[%s1 + $0xe8] sm:$0xf]
    %v79 = vld [vmem:[%s1 + $0xec] sm:$0xf]
    %v80 = vld [vmem:[%s1 + $0xf0] sm:$0xf]
    %v81 = vld [vmem:[%s1 + $0xf4] sm:$0xf]
    %v82 = vld [vmem:[%s1 + $0xf8] sm:$0xf]
    %v83 = vld [vmem:[%s1 + $0xfc] sm:$0xf]
    %v84 = vld [vmem:[%s1 + $0x100] sm:$0xf]
    %v85 = vld [vmem:[%s1 + $0x104] sm:$0xf]
    %v86 = vld [vmem:[%s1 + $0x108] sm:$0xf]
    %v87 = vld [vmem:[%s1 + $0x10c] sm:$0xf]
    %v88 = vld [vmem:[%s1 + $0x110] sm:$0xf]
    %v89 = vld [vmem:[%s1 + $0x114] sm:$0xf]
    %v90 = vld [vmem:[%s1 + $0x118] sm:$0xf]
    %v91 = vld [vmem:[%s1 + $0x11c] sm:$0xf]
    %v92 = vld [vmem:[%s1 + $0x120] sm:$0xf]
    %v93 = vld [vmem:[%s1 + $0x124] sm:$0xf]
    %v94 = vld [vmem:[%s1 + $0x128] sm:$0xf]
    %v95 = vld [vmem:[%s1 + $0x12c] sm:$0xf]
    %v96 = vld [vmem:[%s1 + $0x130] sm:$0xf]
    %v97 = vld [vmem:[%s1 + $0x134] sm:$0xf]
    %v98 = vld [vmem:[%s1 + $0x138] sm:$0xf]
    %v99 = vld [vmem:[%s1 + $0x13c] sm:$0xf]
    %v100 = vld [vmem:[%s1 + $0x140] sm:$0xf]
    %v101 = vld [vmem:[%s1 + $0x144] sm:$0xf]
    %v102 = vld [vmem:[%s1 + $0x148] sm:$0xf]
    %v103 = vld [vmem:[%s1 + $0x14c] sm:$0xf]
    %v104 = vld [vmem:[%s1 + $0x150] sm:$0xf]
    %v105 = vld [vmem:[%s1 + $0x154] sm:$0xf]
    %v106 = vld [vmem:[%s1 + $0x158] sm:$0xf]
    %v107 = vld [vmem:[%s1 + $0x15c] sm:$0xf]
    %v108 = vld [vmem:[%s1 + $0x160] sm:$0xf]
    %v109 = vld [vmem:[%s1 + $0x164] sm:$0xf]
    %v110 = vld [vmem:[%s1 + $0x168] sm:$0xf]
    %v111 = vld [vmem:[%s1 + $0x16c] sm:$0xf]
    %v112 = vld [vmem:[%s1 + $0x170] sm:$0xf]
    %v113 = vld [vmem:[%s1 + $0x174] sm:$0xf]
    %v114 = vld [vmem:[%s1 + $0x178] sm:$0xf]
    %v115 = vld [vmem:[%s1 + $0x17c] sm:$0xf]
    %v116 = vlaneseq
    %v117 = vshrl.u32 %v116, 7
    %v118 = vsub.s32 0, %v117
    %v119 = vrot.slane %v16, %v118
    %v121 = vcombine.high %v19, %v19
    %v123 = vunpack.c.l.s4 1966171168
    %v124 = vunpack.c.0.s8 %v123
    %v125 = vlaneseq
    %v126 = vshrl.u32 %v125, 7
    %v127 = vsub.s32 %v124, %v126
    %v128 = vrot.slane %v19, %v127
    %v130 = vunpack.c.l.s4 1966171168
    %v131 = vunpack.c.0.s8 %v130
    %v132 = vlaneseq
    %v133 = vshrl.u32 %v132, 7
    %v134 = vsub.s32 %v131, %v133
    %v135 = vrot.slane %v121, %v134
    %v136 = vcombine.high %v128, %v128
    %v137 = vcombine.high %v135, %v135
    %v139 = vunpack.c.l.s4 1966171168
    %v140 = vunpack.c.0.s8 %v139
    %v141 = vlaneseq
    %v142 = vshrl.u32 %v141, 7
    %v143 = vsub.s32 %v140, %v142
    %v144 = vrot.slane %v128, %v143
    %v146 = vunpack.c.l.s4 1966171168
    %v147 = vunpack.c.0.s8 %v146
    %v148 = vlaneseq
    %v149 = vshrl.u32 %v148, 7
    %v150 = vsub.s32 %v147, %v149
    %v151 = vrot.slane %v135, %v150
    %v153 = vunpack.c.l.s4 1966171168
    %v154 = vunpack.c.0.s8 %v153
    %v155 = vlaneseq
    %v156 = vshrl.u32 %v155, 7
    %v157 = vsub.s32 %v154, %v156
    %v158 = vrot.slane %v136, %v157
    %v160 = vunpack.c.l.s4 1966171168
    %v161 = vunpack.c.0.s8 %v160
    %v162 = vlaneseq
    %v163 = vshrl.u32 %v162, 7
    %v164 = vsub.s32 %v161, %v163
    %v165 = vrot.slane %v137, %v164
    %v166 = vcombine.high %v144, %v144
    %v167 = vcombine.high %v158, %v158
    %v270 = vunpack.c.l.b16 %v20
    %v271 = vunpack.c.l.b16 %v21
    %v272 = vunpack.c.l.b16 %v22
    %v273 = vunpack.c.l.b16 %v23
    %v274 = vunpack.c.l.b16 %v24
    %v275 = vunpack.c.l.b16 %v25
    %v276 = vunpack.c.l.b16 %v26
    %v277 = vunpack.c.l.b16 %v27
    %v278 = vunpack.c.l.b16 %v28
    %v279 = vunpack.c.l.b16 %v29
    %v280 = vunpack.c.l.b16 %v30
    %v281 = vunpack.c.l.b16 %v31
    %v282 = vunpack.c.l.b16 %v32
    %v283 = vunpack.c.l.b16 %v33
    %v284 = vunpack.c.l.b16 %v34
    %v285 = vunpack.c.l.b16 %v35
    %v286 = vunpack.c.l.b16 %v36
    %v287 = vunpack.c.l.b16 %v37
    %v288 = vunpack.c.l.b16 %v38
    %v289 = vunpack.c.l.b16 %v39
    %v290 = vunpack.c.l.b16 %v40
    %v291 = vunpack.c.l.b16 %v41
    %v292 = vunpack.c.l.b16 %v42
    %v293 = vunpack.c.l.b16 %v43
    %v294 = vunpack.c.l.b16 %v44
    %v295 = vunpack.c.l.b16 %v45
    %v296 = vunpack.c.l.b16 %v46
    %v297 = vunpack.c.l.b16 %v47
    %v298 = vunpack.c.l.b16 %v48
    %v299 = vunpack.c.l.b16 %v49
    %v300 = vunpack.c.l.b16 %v50
    %v301 = vunpack.c.l.b16 %v51
    %v302 = vunpack.c.l.b16 %v52
    %v303 = vunpack.c.l.b16 %v53
    %v304 = vunpack.c.l.b16 %v54
    %v305 = vunpack.c.l.b16 %v55
    %v306 = vunpack.c.l.b16 %v56
    %v307 = vunpack.c.l.b16 %v57
    %v308 = vunpack.c.l.b16 %v58
    %v309 = vunpack.c.l.b16 %v59
    %v310 = vunpack.c.l.b16 %v60
    %v311 = vunpack.c.l.b16 %v61
    %v312 = vunpack.c.l.b16 %v62
    %v313 = vunpack.c.l.b16 %v63
    %v314 = vunpack.c.l.b16 %v64
    %v315 = vunpack.c.l.b16 %v65
    %v316 = vunpack.c.l.b16 %v66
    %v317 = vunpack.c.l.b16 %v67
    %v318 = vunpack.c.l.b16 %v68
    %v319 = vunpack.c.l.b16 %v69
    %v320 = vunpack.c.l.b16 %v70
    %v321 = vunpack.c.l.b16 %v71
    %v322 = vunpack.c.l.b16 %v72
    %v323 = vunpack.c.l.b16 %v73
    %v324 = vunpack.c.l.b16 %v74
    %v325 = vunpack.c.l.b16 %v75
    %v326 = vunpack.c.l.b16 %v76
    %v327 = vunpack.c.l.b16 %v77
    %v328 = vunpack.c.l.b16 %v78
    %v329 = vunpack.c.l.b16 %v79
    %v330 = vunpack.c.l.b16 %v80
    %v331 = vunpack.c.l.b16 %v81
    %v332 = vunpack.c.l.b16 %v82
    %v333 = vunpack.c.l.b16 %v83
    %v334 = vunpack.c.l.b16 %v84
    %v335 = vunpack.c.l.b16 %v85
    %v336 = vunpack.c.l.b16 %v86
    %v337 = vunpack.c.l.b16 %v87
    %v338 = vunpack.c.l.b16 %v88
    %v339 = vunpack.c.l.b16 %v89
    %v340 = vunpack.c.l.b16 %v90
    %v341 = vunpack.c.l.b16 %v91
    %v342 = vunpack.c.l.b16 %v92
    %v343 = vunpack.c.l.b16 %v93
    %v344 = vunpack.c.l.b16 %v94
    %v345 = vunpack.c.l.b16 %v95
    %v346 = vunpack.c.l.b16 %v96
    %v347 = vunpack.c.l.b16 %v97
    %v348 = vunpack.c.l.b16 %v98
    %v349 = vunpack.c.l.b16 %v99
    %v350 = vunpack.c.l.b16 %v100
    %v351 = vunpack.c.l.b16 %v101
    %v352 = vunpack.c.l.b16 %v102
    %v353 = vunpack.c.l.b16 %v103
    %v354 = vunpack.c.l.b16 %v104
    %v355 = vunpack.c.l.b16 %v105
    %v356 = vunpack.c.l.b16 %v106
    %v357 = vunpack.c.l.b16 %v107
    %v358 = vunpack.c.l.b16 %v108
    %v359 = vunpack.c.l.b16 %v109
    %v360 = vunpack.c.l.b16 %v110
    %v361 = vunpack.c.l.b16 %v111
    %v362 = vunpack.c.l.b16 %v112
    %v363 = vunpack.c.l.b16 %v113
    %v364 = vunpack.c.l.b16 %v114
    %v365 = vunpack.c.l.b16 %v115
    %v366 = vpack.c.b16 %v271, %v270
    %v367 = vpack.c.b16 %v273, %v272
    %v368 = vpack.c.b16 %v275, %v274
    %v369 = vpack.c.b16 %v277, %v276
    %v370 = vpack.c.b16 %v279, %v278
    %v371 = vpack.c.b16 %v281, %v280
    %v372 = vpack.c.b16 %v283, %v282
    %v373 = vpack.c.b16 %v285, %v284
    %v374 = vpack.c.b16 %v287, %v286
    %v375 = vpack.c.b16 %v289, %v288
    %v376 = vpack.c.b16 %v291, %v290
    %v377 = vpack.c.b16 %v293, %v292
    %v378 = vpack.c.b16 %v295, %v294
    %v379 = vpack.c.b16 %v297, %v296
    %v380 = vpack.c.b16 %v299, %v298
    %v381 = vpack.c.b16 %v301, %v300
    %v382 = vpack.c.b16 %v303, %v302
    %v383 = vpack.c.b16 %v305, %v304
    %v384 = vpack.c.b16 %v307, %v306
    %v385 = vpack.c.b16 %v309, %v308
    %v386 = vpack.c.b16 %v311, %v310
    %v387 = vpack.c.b16 %v313, %v312
    %v388 = vpack.c.b16 %v315, %v314
    %v389 = vpack.c.b16 %v317, %v316
    %v390 = vpack.c.b16 %v319, %v318
    %v391 = vpack.c.b16 %v321, %v320
    %v392 = vpack.c.b16 %v323, %v322
    %v393 = vpack.c.b16 %v325, %v324
    %v394 = vpack.c.b16 %v327, %v326
    %v395 = vpack.c.b16 %v329, %v328
    %v396 = vpack.c.b16 %v331, %v330
    %v397 = vpack.c.b16 %v333, %v332
    %v398 = vpack.c.b16 %v335, %v334
    %v399 = vpack.c.b16 %v337, %v336
    %v400 = vpack.c.b16 %v339, %v338
    %v401 = vpack.c.b16 %v341, %v340
    %v402 = vpack.c.b16 %v343, %v342
    %v403 = vpack.c.b16 %v345, %v344
    %v404 = vpack.c.b16 %v347, %v346
    %v405 = vpack.c.b16 %v349, %v348
    %v406 = vpack.c.b16 %v351, %v350
    %v407 = vpack.c.b16 %v353, %v352
    %v408 = vpack.c.b16 %v355, %v354
    %v409 = vpack.c.b16 %v357, %v356
    %v410 = vpack.c.b16 %v359, %v358
    %v411 = vpack.c.b16 %v361, %v360
    %v412 = vpack.c.b16 %v363, %v362
    %v413 = vpack.c.b16 %v365, %v364
    %462 = vmatprep.subr.bf16.mxu0 0
    %463 = vmatpush1.bf16.msra.mxu0 %v366
    %464 = vmatprep.subr.bf16.mxu0 0
    %465 = vmatpush1.bf16.msra.mxu0 %v367
    %466 = vmatprep.subr.bf16.mxu0 0
    %467 = vmatpush1.bf16.msra.mxu0 %v368
    %468 = vmatprep.subr.bf16.mxu0 0
    %469 = vmatpush1.bf16.msra.mxu0 %v369
    %470 = vmatprep.subr.bf16.mxu0 0
    %471 = vmatpush1.bf16.msra.mxu0 %v370
    %472 = vmatprep.subr.bf16.mxu0 0
    %473 = vmatpush1.bf16.msra.mxu0 %v371
    %474 = vmatprep.subr.bf16.mxu0 0
    %475 = vmatpush1.bf16.msra.mxu0 %v372
    %476 = vmatprep.subr.bf16.mxu0 0
    %477 = vmatpush1.bf16.msra.mxu0 %v373
    %478 = vmatprep.subr.bf16.mxu0 0
    %479 = vmatpush1.bf16.msra.mxu0 %v374
    %480 = vmatprep.subr.bf16.mxu0 0
    %481 = vmatpush1.bf16.msra.mxu0 %v375
    %482 = vmatprep.subr.bf16.mxu0 0
    %483 = vmatpush1.bf16.msra.mxu0 %v376
    %484 = vmatprep.subr.bf16.mxu0 0
    %485 = vmatpush1.bf16.msra.mxu0 %v377
    %486 = vmatprep.subr.bf16.mxu0 0
    %487 = vmatpush1.bf16.msra.mxu0 %v378
    %488 = vmatprep.subr.bf16.mxu0 0
    %489 = vmatpush1.bf16.msra.mxu0 %v379
    %490 = vmatprep.subr.bf16.mxu0 0
    %491 = vmatpush1.bf16.msra.mxu0 %v380
    %492 = vmatprep.subr.bf16.mxu0 0
    %493 = vmatpush1.bf16.msra.mxu0 %v381
    %494 = vmatprep.mubr.bf16.mxu0 %v158
    %495 = vmatmul.mubr.bf16.gmra.mrb[0].mxu0 %v144
    %v496 = vpop.f32.mrb[0].mxu0
    %v497 = vadd.f32 %v119, %v496
    %v498 = vpop.f32.mrb[0].mxu0
    %v499 = vpop.f32.mrb[0].mxu0
    %v500 = vpop.f32.mrb[0].mxu0
    %501 = vdwg.mxu0
    %502 = vmatprep.subr.bf16.mxu0 0
    %503 = vmatpush1.bf16.msra.mxu0 %v382
    %504 = vmatprep.subr.bf16.mxu0 0
    %505 = vmatpush1.bf16.msra.mxu0 %v383
    %506 = vmatprep.subr.bf16.mxu0 0
    %507 = vmatpush1.bf16.msra.mxu0 %v384
    %508 = vmatprep.subr.bf16.mxu0 0
    %509 = vmatpush1.bf16.msra.mxu0 %v385
    %510 = vmatprep.subr.bf16.mxu0 0
    %511 = vmatpush1.bf16.msra.mxu0 %v386
    %512 = vmatprep.subr.bf16.mxu0 0
    %513 = vmatpush1.bf16.msra.mxu0 %v387
    %514 = vmatprep.subr.bf16.mxu0 0
    %515 = vmatpush1.bf16.msra.mxu0 %v388
    %516 = vmatprep.subr.bf16.mxu0 0
    %517 = vmatpush1.bf16.msra.mxu0 %v389
    %518 = vmatprep.subr.bf16.mxu0 0
    %519 = vmatpush1.bf16.msra.mxu0 %v390
    %520 = vmatprep.subr.bf16.mxu0 0
    %521 = vmatpush1.bf16.msra.mxu0 %v391
    %522 = vmatprep.subr.bf16.mxu0 0
    %523 = vmatpush1.bf16.msra.mxu0 %v392
    %524 = vmatprep.subr.bf16.mxu0 0
    %525 = vmatpush1.bf16.msra.mxu0 %v393
    %526 = vmatprep.subr.bf16.mxu0 0
    %527 = vmatpush1.bf16.msra.mxu0 %v394
    %528 = vmatprep.subr.bf16.mxu0 0
    %529 = vmatpush1.bf16.msra.mxu0 %v395
    %530 = vmatprep.subr.bf16.mxu0 0
    %531 = vmatpush1.bf16.msra.mxu0 %v396
    %532 = vmatprep.subr.bf16.mxu0 0
    %533 = vmatpush1.bf16.msra.mxu0 %v397
    %534 = vmatprep.mubr.bf16.mxu0 %v167
    %535 = vmatmul.mubr.bf16.gmra.mrb[0].mxu0 %v166
    %v536 = vpop.f32.mrb[0].mxu0
    %v537 = vadd.f32 %v497, %v536
    %v538 = vpop.f32.mrb[0].mxu0
    %v539 = vpop.f32.mrb[0].mxu0
    %v540 = vpop.f32.mrb[0].mxu0
    %541 = vdwg.mxu0
    %542 = vmatprep.subr.bf16.mxu0 0
    %543 = vmatpush1.bf16.msra.mxu0 %v398
    %544 = vmatprep.subr.bf16.mxu0 0
    %545 = vmatpush1.bf16.msra.mxu0 %v399
    %546 = vmatprep.subr.bf16.mxu0 0
    %547 = vmatpush1.bf16.msra.mxu0 %v400
    %548 = vmatprep.subr.bf16.mxu0 0
    %549 = vmatpush1.bf16.msra.mxu0 %v401
    %550 = vmatprep.subr.bf16.mxu0 0
    %551 = vmatpush1.bf16.msra.mxu0 %v402
    %552 = vmatprep.subr.bf16.mxu0 0
    %553 = vmatpush1.bf16.msra.mxu0 %v403
    %554 = vmatprep.subr.bf16.mxu0 0
    %555 = vmatpush1.bf16.msra.mxu0 %v404
    %556 = vmatprep.subr.bf16.mxu0 0
    %557 = vmatpush1.bf16.msra.mxu0 %v405
    %558 = vmatprep.subr.bf16.mxu0 0
    %559 = vmatpush1.bf16.msra.mxu0 %v406
    %560 = vmatprep.subr.bf16.mxu0 0
    %561 = vmatpush1.bf16.msra.mxu0 %v407
    %562 = vmatprep.subr.bf16.mxu0 0
    %563 = vmatpush1.bf16.msra.mxu0 %v408
    %564 = vmatprep.subr.bf16.mxu0 0
    %565 = vmatpush1.bf16.msra.mxu0 %v409
    %566 = vmatprep.subr.bf16.mxu0 0
    %567 = vmatpush1.bf16.msra.mxu0 %v410
    %568 = vmatprep.subr.bf16.mxu0 0
    %569 = vmatpush1.bf16.msra.mxu0 %v411
    %570 = vmatprep.subr.bf16.mxu0 0
    %571 = vmatpush1.bf16.msra.mxu0 %v412
    %572 = vmatprep.subr.bf16.mxu0 0
    %573 = vmatpush1.bf16.msra.mxu0 %v413
    %574 = vmatprep.mubr.bf16.mxu0 %v165
    %575 = vmatmul.mubr.bf16.gmra.mrb[0].mxu0 %v151
    %v576 = vpop.f32.mrb[0].mxu0
    %v577 = vadd.f32 %v537, %v576
    %v578 = vpop.f32.mrb[0].mxu0
    %v579 = vpop.f32.mrb[0].mxu0
    %v580 = vpop.f32.mrb[0].mxu0
    %581 = vdwg.mxu0
    %vm582 = vcmask 517120
    %v583 = vsel %vm582, %v577, 0.0
    %v584 = vrot.slane %v583, 4
    %v585 = vadd.f32 %v583, %v584
    %v586 = vrot.slane %v585, 2
    %v587 = vadd.f32 %v585, %v586
    %v588 = vrot.slane %v587, 1
    %v589 = vadd.f32 %v587, %v588
    %v590 = vmul.f32 %v589, 0.5
    %v591 = vmul.f32 %v577, %v577
    %v592 = vsel %vm582, %v591, 0.0
    %v593 = vrot.slane %v592, 4
    %v594 = vadd.f32 %v592, %v593
    %v595 = vrot.slane %v594, 2
    %v596 = vadd.f32 %v594, %v595
    %v597 = vrot.slane %v596, 1
    %v598 = vadd.f32 %v596, %v597
    %v599 = vmul.f32 %v598, 0.5
    %v600 = vmul.f32 %v590, %v590
    %v601 = vsub.f32 %v599, %v600
    %v602 = vmax.f32 %v601, 0.0
    %v603 = vsub.f32 %v577, %v590
    %v604 = vlaneseq
    %v605 = vshrl.u32 %v604, 7
    %v606 = vsub.s32 0, %v605
    %v607 = vrot.slane %v17, %v606
    %v608 = vmul.f32 %v607, %v603
    %v609 = vadd.f32 %v602, 1e-05
    %v610 = vrsqrt.pop %v609
    %v611 = vmul.f32 %v608, %v610
    %v612 = vlaneseq
    %v613 = vshrl.u32 %v612, 7
    %v614 = vsub.s32 0, %v613
    %v615 = vrot.slane %v18, %v614
    %v616 = vadd.f32 %v611, %v615
    %v617 = vmax.f32 %v616, 0.0
    %v618 = vld [vmem:[%s2] sm:$0xff]
    %v619 = vld [vmem:[%s2 + $0x8] sm:$0xff]
    %v620 = vld [vmem:[%s2 + $0x10] sm:$0xff]
    %v621 = vld [vmem:[%s2 + $0x18] sm:$0xff]
    %v622 = vld [vmem:[%s2 + $0x20] sm:$0xff]
    %v623 = vld [vmem:[%s2 + $0x28] sm:$0xff]
    %v624 = vld [vmem:[%s2 + $0x30] sm:$0xff]
    %v625 = vld [vmem:[%s2 + $0x38] sm:$0xff]
    %v626 = vld [vmem:[%s2 + $0x40] sm:$0x1]
    %v627 = vlaneseq
    %v628 = vshrl.u32 %v627, 7
    %v629 = vsub.s32 0, %v628
    %v630 = vrot.slane %v626, %v629
    %vm631 = vcmask 523264
    %v633 = vsel %vm631, %v617, 0
    %635 = vmatprep.subr.mxu0 0.0
    %636 = vmatpush1.msra.mxu0 %v618
    %637 = vmatprep.subr.mxu0 0.0
    %638 = vmatpush1.msra.mxu0 %v619
    %639 = vmatprep.subr.mxu0 0.0
    %640 = vmatpush1.msra.mxu0 %v620
    %641 = vmatprep.subr.mxu0 0.0
    %642 = vmatpush1.msra.mxu0 %v621
    %643 = vmatprep.subr.mxu0 0.0
    %644 = vmatpush1.msra.mxu0 %v622
    %645 = vmatprep.subr.mxu0 0.0
    %646 = vmatpush1.msra.mxu0 %v623
    %647 = vmatprep.subr.mxu0 0.0
    %648 = vmatpush1.msra.mxu0 %v624
    %649 = vmatprep.subr.mxu0 0.0
    %650 = vmatpush1.msra.mxu0 %v625
    %651 = vmatprep.subr.mxu0 0.0
    %652 = vmatpush1.msra.mxu0 0.0
    %653 = vmatprep.subr.mxu0 0.0
    %654 = vmatpush1.msra.mxu0 0.0
    %655 = vmatprep.subr.mxu0 0.0
    %656 = vmatpush1.msra.mxu0 0.0
    %657 = vmatprep.subr.mxu0 0.0
    %658 = vmatpush1.msra.mxu0 0.0
    %659 = vmatprep.subr.mxu0 0.0
    %660 = vmatpush1.msra.mxu0 0.0
    %661 = vmatprep.subr.mxu0 0.0
    %662 = vmatpush1.msra.mxu0 0.0
    %663 = vmatprep.subr.mxu0 0.0
    %664 = vmatpush1.msra.mxu0 0.0
    %665 = vmatprep.subr.mxu0 0.0
    %666 = vmatpush1.msra.mxu0 0.0
    %667 = vmatprep.subr.mxu0 0.0
    %668 = vmatpush1.msra.mxu0 0.0
    %669 = vmatprep.subr.mxu0 0.0
    %670 = vmatpush1.msra.mxu0 0.0
    %671 = vmatprep.subr.mxu0 0.0
    %672 = vmatpush1.msra.mxu0 0.0
    %673 = vmatprep.subr.mxu0 0.0
    %674 = vmatpush1.msra.mxu0 0.0
    %675 = vmatprep.subr.mxu0 0.0
    %676 = vmatpush1.msra.mxu0 0.0
    %677 = vmatprep.subr.mxu0 0.0
    %678 = vmatpush1.msra.mxu0 0.0
    %679 = vmatprep.subr.mxu0 0.0
    %680 = vmatpush1.msra.mxu0 0.0
    %681 = vmatprep.subr.mxu0 0.0
    %682 = vmatpush1.msra.mxu0 0.0
    %683 = vmatprep.subr.mxu0 0.0
    %684 = vmatpush1.msra.mxu0 0.0
    %685 = vmatprep.subr.mxu0 0.0
    %686 = vmatpush1.msra.mxu0 0.0
    %687 = vmatprep.subr.mxu0 0.0
    %688 = vmatpush1.msra.mxu0 0.0
    %689 = vmatprep.subr.mxu0 0.0
    %690 = vmatpush1.msra.mxu0 0.0
    %691 = vmatprep.subr.mxu0 0.0
    %692 = vmatpush1.msra.mxu0 0.0
    %693 = vmatprep.subr.mxu0 0.0
    %694 = vmatpush1.msra.mxu0 0.0
    %695 = vmatprep.subr.mxu0 0.0
    %696 = vmatpush1.msra.mxu0 0.0
    %697 = vmatprep.subr.mxu0 0.0
    %698 = vmatpush1.msra.mxu0 0.0
    %699 = vmatprep.mubr.f32.mxu0 0.0
    %700 = vmatmul.mubr.f32.gmra.mrb[0].mxu0 %v633
    %v701 = vpop.f32.mrb[0].mxu0
    %v702 = vadd.f32 %v630, %v701
    %v703 = vpop.f32.mrb[0].mxu0
    %704 = vdwg.mxu0
    %705 = vst [vmem:[#allocation2] sm:$0x3] %v702
    // Predicated region
    $region14: #{byol_forward.1} parent=1 // pred_check
      _
    $region15: #{byol_forward.1} parent=1 // pred_check_branch
      %707 = sbr.rel (0) target = $region17
    $region16: #{byol_forward.1} parent=1 // pred_region
      %s709 = ssub.s32 32, 32
      %710 = vsyncadd [#allocation3], %s709
      %s712 = sshll.u32 [#allocation2], 4
      %s713 = int_to_ptr.vmem [resolvable:$true] %s712
      %715 = dma.vmem_to_hbm [thread:$0]  %s713, 32, %s3, [#allocation3]
    $region17: #{byol_forward.1} parent=1 // pred_fallthru
      _
    // Predicated region
    $region18: #{byol_forward.1} parent=1 // pred_check
      _
    $region19: #{byol_forward.1} parent=1 // pred_check_branch
      %717 = sbr.rel (0) target = $region21
    $region20: #{byol_forward.1} parent=1 // pred_region
      %718 = dma.done [#allocation3], 32
    $region21: #{byol_forward.1} parent=1 // pred_fallthru
      _
    %719 = vsyncpa [#allocation3], 1

</llo_original>
